<compile_context>
chip_gen: v6e
topology: v6e:2x2x1
jax: 0.10.0
libtpu: 0.0.40
codegen_flags: <defaults>
</compile_context>

<pallas_src>
import jax
import jax.numpy as jnp
from jax.experimental import pallas as pl
from jax.experimental.pallas import tpu as pltpu


# ----------------------------------------------------------------------------
# Primary path: direct HBM -> HBM DMA concat (lane-aligned concat boundary).
# ----------------------------------------------------------------------------
def _concat_dma_kernel(x_hbm, y_hbm, o_hbm, sems):
    n1 = x_hbm.shape[1]
    n2 = y_hbm.shape[1]
    # Two slab copies into disjoint, lane-aligned column windows of the output.
    cp_x = pltpu.make_async_copy(x_hbm, o_hbm.at[:, 0:n1], sems.at[0])
    cp_y = pltpu.make_async_copy(y_hbm, o_hbm.at[:, n1:n1 + n2], sems.at[1])
    cp_x.start()
    cp_y.start()
    cp_x.wait()
    cp_y.wait()


def _concat_dma(x2, y2):
    B, N1 = x2.shape
    N2 = y2.shape[1]
    total_bytes = 2 * B * (N1 + N2) * x2.dtype.itemsize  # read + write
    return pl.pallas_call(
        _concat_dma_kernel,
        out_shape=jax.ShapeDtypeStruct((B, N1 + N2), x2.dtype),
        in_specs=[
            pl.BlockSpec(memory_space=pl.ANY),
            pl.BlockSpec(memory_space=pl.ANY),
        ],
        out_specs=pl.BlockSpec(memory_space=pl.ANY),
        scratch_shapes=[pltpu.SemaphoreType.DMA((2,))],
        cost_estimate=pl.CostEstimate(
            flops=0, transcendentals=0, bytes_accessed=total_bytes),
    )(x2, y2)


# ----------------------------------------------------------------------------
# Fallback path: lane-dense pipelined VMEM copy (any shapes).
# ----------------------------------------------------------------------------
def _concat_vmem_kernel(x_ref, y_ref, o_ref):
    c1 = x_ref.shape[1]
    c2 = y_ref.shape[1]
    # Static channel-slice writes; lane (last) axis is fully dense.
    o_ref[:, 0:c1, :] = x_ref[...]
    o_ref[:, c1:c1 + c2, :] = y_ref[...]


def _vmem_budget():
    """(vmem_limit_bytes, target_output_tile_bytes), generation-aware."""
    try:
        cap = pltpu.get_tpu_info().vmem_capacity_bytes
    except Exception:
        cap = 64 * 1024 * 1024  # conservative (v7x-sized) default
    limit = min((cap * 3) // 4, 96 * 1024 * 1024)   # scoped VMEM we request
    tile = max(256 * 1024, limit // 8)              # ~4x tile (dbl-buffer) + slack
    return int(limit), int(tile)


def _pick_hw_block(hw, c_total, itemsize, tile_bytes):
    """Lane-block size: a multiple of 128 capped by the tile budget (ragged
    tails handled by a cdiv grid), or the full extent when hw < 128."""
    if hw < 128:
        return hw  # block dim == full array dim is always legal
    max_lanes = max(128, tile_bytes // max(1, c_total * itemsize))
    blk = (min(hw, max_lanes) // 128) * 128
    return max(128, blk)


def _pick_batch_block(b, c_total, hw_blk, itemsize, tile_bytes):
    """Batch elements per grid step so each step moves ~tile_bytes."""
    per_batch = max(1, c_total * hw_blk * itemsize)
    return int(max(1, min(b, tile_bytes // per_batch)))


def _concat_vmem(x3, y3):
    B, C1, HW = x3.shape
    C2 = y3.shape[1]
    C = C1 + C2
    itemsize = x3.dtype.itemsize

    vmem_limit, tile_bytes = _vmem_budget()
    hw_blk = _pick_hw_block(HW, C, itemsize, tile_bytes)
    bb = _pick_batch_block(B, C, hw_blk, itemsize, tile_bytes)
    grid = (pl.cdiv(B, bb), pl.cdiv(HW, hw_blk))
    total_bytes = 2 * B * C * HW * itemsize

    return pl.pallas_call(
        _concat_vmem_kernel,
        out_shape=jax.ShapeDtypeStruct((B, C, HW), x3.dtype),
        grid=grid,
        in_specs=[
            pl.BlockSpec((bb, C1, hw_blk), lambda b, s: (b, 0, s)),
            pl.BlockSpec((bb, C2, hw_blk), lambda b, s: (b, 0, s)),
        ],
        out_specs=pl.BlockSpec((bb, C, hw_blk), lambda b, s: (b, 0, s)),
        compiler_params=pltpu.CompilerParams(
            dimension_semantics=("parallel", "parallel"),
            vmem_limit_bytes=vmem_limit),
        cost_estimate=pl.CostEstimate(
            flops=0, transcendentals=0, bytes_accessed=total_bytes),
    )(x3, y3)


# ----------------------------------------------------------------------------
# Public entry point: torch.cat([x, y], dim=1) for NCHW tensors.
# ----------------------------------------------------------------------------
def concat_channels(x, y):
    assert x.ndim == y.ndim == 4, "expecting NCHW inputs"
    assert x.shape[0] == y.shape[0]
    assert x.shape[2:] == y.shape[2:]
    assert x.dtype == y.dtype
    B, C1, H, W = x.shape
    C2 = y.shape[1]
    C = C1 + C2
    HW = H * W
    n1, n2 = C1 * HW, C2 * HW

    if n1 % 128 == 0 and n2 % 128 == 0:
        # Concat boundary is a 128-aligned lane offset in the flattened layout:
        # pure HBM->HBM DMA, no VMEM staging.
        out2 = _concat_dma(x.reshape(B, n1), y.reshape(B, n2))
        return out2.reshape(B, C, H, W)

    # General path: lane-dense (B, C, H*W) pipelined copy.
    out3 = _concat_vmem(x.reshape(B, C1, HW), y.reshape(B, C2, HW))
    return out3.reshape(B, C, H, W)


if __name__ == "__main__":
    key = jax.random.PRNGKey(0)
    kx, ky, kx2, ky2 = jax.random.split(key, 4)

    # Primary test (module's canonical usage): NCHW, batch=2, channels=4, 16x16.
    x = jax.random.normal(kx, (2, 4, 16, 16), dtype=jnp.float32)
    y = jax.random.normal(ky, (2, 4, 16, 16), dtype=jnp.float32)
    out = jax.block_until_ready(concat_channels(x, y))
    ref = jnp.concatenate([x, y], axis=1)
    assert out.shape == (2, 8, 16, 16)
    assert jnp.array_equal(out, ref)

    # Also exercise the general (non-lane-aligned) fallback path: odd spatial.
    x2 = jax.random.normal(kx2, (2, 4, 5, 7), dtype=jnp.float32)
    y2 = jax.random.normal(ky2, (2, 4, 5, 7), dtype=jnp.float32)
    out2 = jax.block_until_ready(concat_channels(x2, y2))
    assert jnp.array_equal(out2, jnp.concatenate([x2, y2], axis=1))

    print("KERNEL_OK")
</pallas_src>

<mosaic_0001>
module attributes {stable_mosaic.version = 11 : i64} {
  func.func @_concat_dma_kernel(%arg0: memref<2x1024xf32, #tpu.memory_space<any>>, %arg1: memref<2x1024xf32, #tpu.memory_space<any>>, %arg2: memref<2x2048xf32, #tpu.memory_space<any>>, %arg3: memref<2x!tpu.dma_semaphore, #tpu.memory_space<semaphore_mem>>) attributes {dimension_semantics = [], scalar_prefetch = 0 : i64, scratch_operands = 1 : i64, tpu.core_type = #tpu.core_type<tc>} {
    %c0_i32 = arith.constant 0 : i32
    %c0_i32_0 = arith.constant 0 : i32
    %c0_i32_1 = arith.constant 0 : i32
    %0 = tpu.memref_slice %arg2[%c0_i32_0, %c0_i32_1] : memref<2x2048xf32, #tpu.memory_space<any>> -> memref<2x1024xf32, #tpu.memory_space<any>>
    %1 = tpu.memref_slice %arg3[%c0_i32] : memref<2x!tpu.dma_semaphore, #tpu.memory_space<semaphore_mem>> -> memref<1x!tpu.dma_semaphore, #tpu.memory_space<semaphore_mem>>
    %2 = tpu.memref_squeeze %1 : memref<1x!tpu.dma_semaphore, #tpu.memory_space<semaphore_mem>> -> memref<!tpu.dma_semaphore, #tpu.memory_space<semaphore_mem>>
    tpu.enqueue_dma source(%arg0 : memref<2x1024xf32, #tpu.memory_space<any>>) target(%0 : memref<2x1024xf32, #tpu.memory_space<any>>) target_semaphore(%2 : memref<!tpu.dma_semaphore, #tpu.memory_space<semaphore_mem>>)
    %c1_i32 = arith.constant 1 : i32
    %c0_i32_2 = arith.constant 0 : i32
    %c1024_i32 = arith.constant 1024 : i32
    %3 = tpu.memref_slice %arg2[%c0_i32_2, %c1024_i32] : memref<2x2048xf32, #tpu.memory_space<any>> -> memref<2x1024xf32, #tpu.memory_space<any>>
    %4 = tpu.memref_slice %arg3[%c1_i32] : memref<2x!tpu.dma_semaphore, #tpu.memory_space<semaphore_mem>> -> memref<1x!tpu.dma_semaphore, #tpu.memory_space<semaphore_mem>>
    %5 = tpu.memref_squeeze %4 : memref<1x!tpu.dma_semaphore, #tpu.memory_space<semaphore_mem>> -> memref<!tpu.dma_semaphore, #tpu.memory_space<semaphore_mem>>
    tpu.enqueue_dma source(%arg1 : memref<2x1024xf32, #tpu.memory_space<any>>) target(%3 : memref<2x1024xf32, #tpu.memory_space<any>>) target_semaphore(%5 : memref<!tpu.dma_semaphore, #tpu.memory_space<semaphore_mem>>)
    %c0_i32_3 = arith.constant 0 : i32
    %c0_i32_4 = arith.constant 0 : i32
    %c0_i32_5 = arith.constant 0 : i32
    %6 = tpu.memref_slice %arg2[%c0_i32_4, %c0_i32_5] : memref<2x2048xf32, #tpu.memory_space<any>> -> memref<2x1024xf32, #tpu.memory_space<any>>
    %7 = tpu.memref_slice %arg3[%c0_i32_3] : memref<2x!tpu.dma_semaphore, #tpu.memory_space<semaphore_mem>> -> memref<1x!tpu.dma_semaphore, #tpu.memory_space<semaphore_mem>>
    %8 = tpu.memref_squeeze %7 : memref<1x!tpu.dma_semaphore, #tpu.memory_space<semaphore_mem>> -> memref<!tpu.dma_semaphore, #tpu.memory_space<semaphore_mem>>
    tpu.wait_dma2 semaphore(%8 : memref<!tpu.dma_semaphore, #tpu.memory_space<semaphore_mem>>) src(%arg0 : memref<2x1024xf32, #tpu.memory_space<any>>) dst(%6 : memref<2x1024xf32, #tpu.memory_space<any>>)
    %c1_i32_6 = arith.constant 1 : i32
    %c0_i32_7 = arith.constant 0 : i32
    %c1024_i32_8 = arith.constant 1024 : i32
    %9 = tpu.memref_slice %arg2[%c0_i32_7, %c1024_i32_8] : memref<2x2048xf32, #tpu.memory_space<any>> -> memref<2x1024xf32, #tpu.memory_space<any>>
    %10 = tpu.memref_slice %arg3[%c1_i32_6] : memref<2x!tpu.dma_semaphore, #tpu.memory_space<semaphore_mem>> -> memref<1x!tpu.dma_semaphore, #tpu.memory_space<semaphore_mem>>
    %11 = tpu.memref_squeeze %10 : memref<1x!tpu.dma_semaphore, #tpu.memory_space<semaphore_mem>> -> memref<!tpu.dma_semaphore, #tpu.memory_space<semaphore_mem>>
    tpu.wait_dma2 semaphore(%11 : memref<!tpu.dma_semaphore, #tpu.memory_space<semaphore_mem>>) src(%arg1 : memref<2x1024xf32, #tpu.memory_space<any>>) dst(%9 : memref<2x1024xf32, #tpu.memory_space<any>>)
    return
  }
}

</mosaic_0001>

<llo_original>
// kernel: tpu_custom_call.1
$region0: #{tpu_custom_call.1}
  #allocation0 [shape = 'u32[]', space=smem, size = 0x4, offset = 0x4, fixed_abs, tag = 'smem constant byte address 0x4 - core index']
  #allocation1 [shape = 'u32[144,128]{1,0:T(1,128)}', space=vmem, size = 0x12000, scoped, tag = 'internal scratch']
  #allocation2 [shape = 's32[2]{0}', space=sflag, size = 0x8, scoped, tag = 'scratch operand']
  #allocation3 [shape = 's32[]', space=sflag, size = 0x4, offset = 0, fixed_abs, tag = 'sflag constant byte address 0x0 - dummy sync flag']
  #allocation4 [shape = 'u32[0]{0}', space=smem, size = 0, offset = 0, fixed_abs, tag = 'smem constant byte address 0x0 - null']
  #allocation5 [shape = 's32[]', space=sflag, size = 0x4, offset = 0, fixed_abs, tag = 'sflag constant byte address 0x0 - dummy sync flag']
  #allocation6 [shape = 'u32[0]{0}', space=smem, size = 0, offset = 0, fixed_abs, tag = 'smem constant byte address 0x0 - null']
  %s0 = inlined_call_operand.hbm [shape: f32[2,1024], index: 0, kind: input, shape index: {}]
  %s1 = inlined_call_operand.hbm [shape: f32[2,1024], index: 1, kind: input, shape index: {}]
  %s2 = inlined_call_operand.hbm [shape: f32[2,2048], index: 2, kind: output, shape index: {}]
  %s3 = sld [smem:[#allocation0]]
  $region2: #{tpu_custom_call.1} parent=0
    _
  %s5 = ssub.s32 1, %s3
  %s6 = scalar_select 0, %s5, %s3
  %s8 = sshll.u32 1, 14
  %s9 = sxor.u32 4294967295, %s8
  %13 = dma.general %s0, 256, %s2, [#allocation2], 131072, [#allocation4], 0, 0
  %s14 = scalar_lea.hbm %s2, 256
  %s15 = scalar_lea.sflag [#allocation2], 1
  %s17 = sshll.u32 1, 14
  %s18 = sxor.u32 4294967295, %s17
  %22 = dma.general %s1, 256, %s14, %s15, 131072, [#allocation6], 0, 0
  %s23 = smul.u32 2, 1
  %s24 = smul.u32 %s23, 8
  %s25 = sshll.u32 %s24, 4
  %26 = dma.done [#allocation2], %s25
  %s27 = sshll.u32 %s24, 4
  %28 = dma.done %s15, %s27
  %29 = vsyncmov [#allocation2]
  %s30 = vpop.sfrf %29
  %p31 = scmp.eq.s32.totalorder %s30, 0
  %p32 = pneg %p31
  %34 = shalt.err (%p32)
  %s35 = scalar_lea.sflag [#allocation2], 1
  %36 = vsyncmov %s35
  %s37 = vpop.sfrf %36
  %p38 = scmp.eq.s32.totalorder %s37, 0
  %p39 = pneg %p38
  %41 = shalt.err (%p39)

</llo_original>
